<compile_context>
chip_gen: v7x
topology: tpu7x:2x2x1
jax: 0.10.0
libtpu: 0.0.40
codegen_flags: <defaults>
</compile_context>

<pallas_src>
import functools

import jax
import jax.numpy as jnp
from jax.experimental import pallas as pl
from jax.experimental.pallas import tpu as pltpu


# ---------------------------------------------------------------------------
# Pass 1: conv (one MXU matmul per M tile) + bias + masked partial column sums
# ---------------------------------------------------------------------------
def _conv_partial_kernel(w_ref, b_ref, p_ref, out_ref, psum_ref, *,
                         m_valid, tile_m):
    i = pl.program_id(0)
    # [Cout, K](bf16) @ [K, TILE_M](bf16) -> f32 accumulation on the MXU.
    acc = jnp.dot(w_ref[...], p_ref[...], preferred_element_type=jnp.float32)
    out = acc + b_ref[...]                       # (Cout, TILE_M), f32 VPU math
    out_ref[...] = out                           # lane-dense store

    # Masked partial column sum for the per-unit mean (padded tail columns of
    # the last tile must not bias the mean).
    col = jax.lax.broadcasted_iota(jnp.int32, out.shape, 1) + i * tile_m
    s = jnp.sum(jnp.where(col < m_valid, out, 0.0), axis=1, keepdims=True)
    psum_ref[...] = jnp.broadcast_to(s, psum_ref.shape)       # (Cout, 128)


# ---------------------------------------------------------------------------
# Pass 2: elementwise finalize — zero-mean or unit mean-replacement
# ---------------------------------------------------------------------------
def _finalize_kernel(uid_ref, mean_ref, out_ref, res_ref, *, is_mean_replace):
    out = out_ref[...]                            # (Cout, TILE_M) f32
    mean = mean_ref[...]                          # (Cout, 1)      f32
    if is_mean_replace:
        # mask built from a (Cout, 1) iota, broadcast over lanes by the where
        row = jax.lax.broadcasted_iota(jnp.int32, mean.shape, 0)
        res_ref[...] = jnp.where(row == uid_ref[0], mean, out)
    else:
        res_ref[...] = out - mean


@functools.partial(jax.jit,
                   static_argnames=("enabled", "is_mean_replace", "tile_m"))
def mean_output_replacer_conv(x, weight, bias, unit_id=0, *,
                              enabled=True, is_mean_replace=False,
                              tile_m=1024):
    """Forward of meanOutputReplacer wrapping Conv2d(weight, bias), stride 1,
    SAME padding.  Returns (out, cy_mean, cy_zeromean) in NCHW; cy_* are None
    when the corresponding PyTorch attribute would not be set."""
    B, Cin, H, W = x.shape
    Cout, Cin_w, KH, KW = weight.shape
    assert Cin == Cin_w
    pad = KH // 2

    M = B * H * W
    K = Cin * KH * KW
    tile_m = max(128, (int(tile_m) // 128) * 128)
    tile_m = min(tile_m, pl.cdiv(M, 128) * 128)
    num_tiles = pl.cdiv(M, tile_m)
    m_pad = num_tiles * tile_m

    # --- glue: im2col in the transposed [K, M] layout, bf16 MXU operands ---
    # TODO(synk): a halo-tiled in-kernel conv (9 shifted dot-accumulates from
    # the padded NCHW input) would avoid this KH*KW=9x HBM blow-up of the
    # input stream; kept as wrapper glue here for robustness.
    xp = jnp.pad(x, ((0, 0), (0, 0), (pad, pad), (pad, pad)))
    cols = [xp[:, :, i:i + H, j:j + W] for i in range(KH) for j in range(KW)]
    patches = jnp.stack(cols, axis=2)                 # (B, Cin, KH*KW, H, W)
    patches = patches.transpose(1, 2, 0, 3, 4).reshape(K, M)
    patches = jnp.pad(patches, ((0, 0), (0, m_pad - M)))
    patches_bf = patches.astype(jnp.bfloat16)
    w_bf = weight.reshape(Cout, K).astype(jnp.bfloat16)       # (Cout, K)
    b_col = bias.reshape(Cout, 1).astype(jnp.float32)

    grid = (num_tiles,)
    parallel = pltpu.CompilerParams(dimension_semantics=("parallel",))

    out_t, psum = pl.pallas_call(
        functools.partial(_conv_partial_kernel, m_valid=M, tile_m=tile_m),
        grid=grid,
        in_specs=[
            pl.BlockSpec((Cout, K), lambda i: (0, 0)),
            pl.BlockSpec((Cout, 1), lambda i: (0, 0)),
            pl.BlockSpec((K, tile_m), lambda i: (0, i)),
        ],
        out_specs=(
            pl.BlockSpec((Cout, tile_m), lambda i: (0, i)),
            pl.BlockSpec((Cout, 128), lambda i: (0, i)),
        ),
        out_shape=(
            jax.ShapeDtypeStruct((Cout, m_pad), jnp.float32),       # conv out
            jax.ShapeDtypeStruct((Cout, num_tiles * 128), jnp.float32),
        ),
        compiler_params=parallel,
    )(w_bf, b_col, patches_bf)

    def to_nchw(t):   # channel-major (Cout, m_pad) -> NCHW, single transpose
        return t[:, :M].reshape(Cout, B, H, W).transpose(1, 0, 2, 3)

    if not enabled:
        return to_nchw(out_t), None, None

    # finish the mean from the tiny per-tile partial sums (Cout values total)
    cy_mean = psum.reshape(Cout, num_tiles, 128)[:, :, 0].sum(axis=1) / M
    mean_col = cy_mean.reshape(Cout, 1).astype(jnp.float32)
    uid = jnp.asarray(unit_id, jnp.int32).reshape(1)

    res_t = pl.pallas_call(
        functools.partial(_finalize_kernel, is_mean_replace=is_mean_replace),
        grid=grid,
        in_specs=[
            pl.BlockSpec(memory_space=pltpu.MemorySpace.SMEM),      # unit_id
            pl.BlockSpec((Cout, 1), lambda i: (0, 0)),              # mean
            pl.BlockSpec((Cout, tile_m), lambda i: (0, i)),         # conv out
        ],
        out_specs=pl.BlockSpec((Cout, tile_m), lambda i: (0, i)),
        out_shape=jax.ShapeDtypeStruct((Cout, m_pad), jnp.float32),
        compiler_params=parallel,
    )(uid, mean_col, out_t)

    if is_mean_replace:
        # PyTorch mutates `out` in place -> the forward output IS the
        # mean-replaced tensor; cy_zeromean is not computed in this branch.
        return to_nchw(res_t), cy_mean, None
    return to_nchw(out_t), cy_mean, to_nchw(res_t)
    # TODO(synk): the backward hook (MRS/freezes via norm_i on grad *
    # cy_zeromean) and the ByteTensor multi-unit unit_id variant have no
    # forward-pass Pallas equivalent; not implemented here.


def _reference(x, weight, bias, unit_id, is_mean_replace):
    out = jax.lax.conv_general_dilated(
        x, weight, window_strides=(1, 1), padding="SAME",
        dimension_numbers=("NCHW", "OIHW", "NCHW")) + bias[None, :, None, None]
    out_mean = out.mean(axis=(0, 2, 3))                      # [Cout]
    if is_mean_replace:
        return out.at[:, unit_id].set(out_mean[unit_id]), out_mean, None
    return out, out_mean, out - out_mean[None, :, None, None]


if __name__ == "__main__":
    key = jax.random.PRNGKey(0)
    kx, kw, kb, kx2 = jax.random.split(key, 4)

    Cin, Cout, KH, KW = 4, 8, 3, 3
    # bf16-representable values so the bf16 MXU path is bit-compatible with
    # the f32 XLA reference (only summation order differs).
    weight = (0.1 * jax.random.normal(kw, (Cout, Cin, KH, KW), jnp.float32)
              ).astype(jnp.bfloat16).astype(jnp.float32)
    bias = 0.1 * jax.random.normal(kb, (Cout,), jnp.float32)
    unit_id = 3

    def check(x, tag):
        r_out, r_mean, r_zm = _reference(x, weight, bias, unit_id, False)
        r_rep, _, _ = _reference(x, weight, bias, unit_id, True)

        # enabled=False (plain conv)
        o_off, m_off, z_off = mean_output_replacer_conv(
            x, weight, bias, unit_id, enabled=False, tile_m=128)
        # enabled=True, is_mean_replace=False (zero-mean path)
        o0, m0, z0 = mean_output_replacer_conv(
            x, weight, bias, unit_id, enabled=True, is_mean_replace=False,
            tile_m=128)
        # enabled=True, is_mean_replace=True (mean-replacement path)
        o1, m1, z1 = mean_output_replacer_conv(
            x, weight, bias, unit_id, enabled=True, is_mean_replace=True,
            tile_m=128)
        jax.block_until_ready((o_off, o0, m0, z0, o1, m1))

        tol = dict(atol=5e-4, rtol=1e-4)
        assert m_off is None and z_off is None and z1 is None
        assert jnp.allclose(o_off, r_out, **tol), f"{tag}: disabled out"
        assert jnp.allclose(o0, r_out, **tol), f"{tag}: conv out"
        assert jnp.allclose(m0, r_mean, **tol), f"{tag}: cy_mean"
        assert jnp.allclose(z0, r_zm, **tol), f"{tag}: cy_zeromean"
        assert jnp.allclose(o1, r_rep, **tol), f"{tag}: mean-replace out"
        assert jnp.allclose(m1, r_mean, **tol), f"{tag}: cy_mean (replace)"

    # main shape: B=2, Cin=4, H=W=16 -> M=512 -> four 128-wide M tiles
    x0 = (jax.random.normal(kx, (2, Cin, 16, 16), jnp.float32)
          ).astype(jnp.bfloat16).astype(jnp.float32)
    check(x0, "16x16")

    # ragged shape: B=2, H=W=10 -> M=200 -> exercises the padded-tail masking
    x1 = (jax.random.normal(kx2, (2, Cin, 10, 10), jnp.float32)
          ).astype(jnp.bfloat16).astype(jnp.float32)
    check(x1, "10x10")

    print("KERNEL_OK")
</pallas_src>

<mosaic_0001>
module attributes {stable_mosaic.version = 11 : i64} {
  func.func @_conv_partial_kernel(%arg0: i32, %arg1: memref<8x36xbf16, #tpu.memory_space<vmem>>, %arg2: memref<8x1xf32, #tpu.memory_space<vmem>>, %arg3: memref<36x128xbf16, #tpu.memory_space<vmem>>, %arg4: memref<8x128xf32, #tpu.memory_space<vmem>>, %arg5: memref<8x128xf32, #tpu.memory_space<vmem>>) attributes {dimension_semantics = [#tpu.dimension_semantics<parallel>], iteration_bounds = array<i64: 4>, scalar_prefetch = 0 : i64, scratch_operands = 0 : i64, tpu.core_type = #tpu.core_type<tc>, window_params = [{pipeline_mode = #tpu.pipeline_mode<synchronous>, transform_indices = @transform_0, window_bounds = array<i64: 8, 36>}, {pipeline_mode = #tpu.pipeline_mode<synchronous>, transform_indices = @transform_1, window_bounds = array<i64: 8, 1>}, {transform_indices = @transform_2, window_bounds = array<i64: 36, 128>}, {transform_indices = @transform_3, window_bounds = array<i64: 8, 128>}, {transform_indices = @transform_4, window_bounds = array<i64: 8, 128>}]} {
    %c0 = arith.constant 0 : index
    %c0_0 = arith.constant 0 : index
    %0 = vector.load %arg1[%c0, %c0_0] : memref<8x36xbf16, #tpu.memory_space<vmem>>, vector<8x36xbf16>
    %c0_1 = arith.constant 0 : index
    %c0_2 = arith.constant 0 : index
    %1 = vector.load %arg3[%c0_1, %c0_2] : memref<36x128xbf16, #tpu.memory_space<vmem>>, vector<36x128xbf16>
    %cst = arith.constant dense<0.000000e+00> : vector<8x128xf32>
    %2 = tpu.matmul %0, %1, %cst {dimension_numbers = #tpu.dot_dimension_numbers<[1], [0], [0], [1], [0, 0, 1, 1], [], []>} : vector<8x36xbf16>, vector<36x128xbf16>, vector<8x128xf32> -> vector<8x128xf32>
    %c0_3 = arith.constant 0 : index
    %c0_4 = arith.constant 0 : index
    %3 = vector.load %arg2[%c0_3, %c0_4] : memref<8x1xf32, #tpu.memory_space<vmem>>, vector<8x1xf32>
    %4 = vector.broadcast %3 : vector<8x1xf32> to vector<8x128xf32>
    %5 = arith.addf %2, %4 : vector<8x128xf32>
    %c0_5 = arith.constant 0 : index
    %c0_6 = arith.constant 0 : index
    %6 = vector.load %arg4[%c0_5, %c0_6] : memref<8x128xf32, #tpu.memory_space<vmem>>, vector<8x128xf32>
    tpu.vector_store %arg4[%c0_5, %c0_6], %5 {strides = array<i32>} : memref<8x128xf32, #tpu.memory_space<vmem>>, vector<8x128xf32>,
    %7 = tpu.iota {dimensions = array<i32: 1>} : vector<8x128xi32>
    %c128_i32 = arith.constant 128 : i32
    %8 = arith.muli %arg0, %c128_i32 : i32
    %9 = vector.broadcast %8 : i32 to vector<8x128xi32>
    %10 = arith.addi %7, %9 : vector<8x128xi32>
    %c512_i32 = arith.constant 512 : i32
    %11 = vector.broadcast %c512_i32 : i32 to vector<8x128xi32>
    %12 = arith.cmpi slt, %10, %11 : vector<8x128xi32>
    %cst_7 = arith.constant 0.000000e+00 : f32
    %13 = vector.broadcast %cst_7 : f32 to vector<8x128xf32>
    %14 = arith.select %12, %5, %13 : vector<8x128xi1>, vector<8x128xf32>
    %cst_8 = arith.constant dense<0.000000e+00> : vector<8xf32>
    %15 = vector.multi_reduction <add>, %14, %cst_8 [1] : vector<8x128xf32> to vector<8xf32>
    %16 = vector.shape_cast %15 : vector<8xf32> to vector<8x1xf32>
    %17 = vector.shape_cast %16 : vector<8x1xf32> to vector<8x1xf32>
    %18 = vector.broadcast %17 : vector<8x1xf32> to vector<8x128xf32>
    %c0_9 = arith.constant 0 : index
    %c0_10 = arith.constant 0 : index
    %19 = vector.load %arg5[%c0_9, %c0_10] : memref<8x128xf32, #tpu.memory_space<vmem>>, vector<8x128xf32>
    tpu.vector_store %arg5[%c0_9, %c0_10], %18 {strides = array<i32>} : memref<8x128xf32, #tpu.memory_space<vmem>>, vector<8x128xf32>,
    return
  }
  func.func @transform_0(%arg0: i32) -> (i32, i32) {
    %c0_i32 = arith.constant 0 : i32
    %c0_i32_0 = arith.constant 0 : i32
    %c0_i32_1 = arith.constant 0 : i32
    return %c0_i32, %c0_i32_0 : i32, i32
  }
  func.func @transform_1(%arg0: i32) -> (i32, i32) {
    %c0_i32 = arith.constant 0 : i32
    %c0_i32_0 = arith.constant 0 : i32
    %c0_i32_1 = arith.constant 0 : i32
    return %c0_i32, %c0_i32_0 : i32, i32
  }
  func.func @transform_2(%arg0: i32) -> (i32, i32) {
    %c0_i32 = arith.constant 0 : i32
    %c0_i32_0 = arith.constant 0 : i32
    return %c0_i32, %arg0 : i32, i32
  }
  func.func @transform_3(%arg0: i32) -> (i32, i32) {
    %c0_i32 = arith.constant 0 : i32
    %c0_i32_0 = arith.constant 0 : i32
    return %c0_i32, %arg0 : i32, i32
  }
  func.func @transform_4(%arg0: i32) -> (i32, i32) {
    %c0_i32 = arith.constant 0 : i32
    %c0_i32_0 = arith.constant 0 : i32
    return %c0_i32, %arg0 : i32, i32
  }
}

</mosaic_0001>

<llo_original>
// kernel: mean_output_replacer_conv.1
$region0: #{mean_output_replacer_conv.1}
  #allocation0 [shape = 'u32[]', space=smem, size = 0x4, offset = 0x4, fixed_abs, tag = 'smem constant byte address 0x4 - core index']
  #allocation1 [shape = 'u32[144,128]{1,0:T(1,128)}', space=vmem, size = 0x12000, scoped, tag = 'internal scratch']
  %s0 = inlined_call_operand.vmem [shape: bf16[8,36], index: 0, kind: input, shape index: {}]
  %s1 = inlined_call_operand.vmem [shape: f32[8,1], index: 1, kind: input, shape index: {}]
  %s2 = inlined_call_operand.vmem [shape: bf16[36,512], index: 2, kind: input, shape index: {}]
  %s3 = inlined_call_operand.vmem [shape: f32[8,512], index: 3, kind: output, shape index: {0}]
  %s4 = inlined_call_operand.hbm [shape: f32[8,512], index: 4, kind: output, shape index: {1}]
  %5 = xla_tuple %s3, %s4
  %s6 = sld [smem:[#allocation0]]
  $region94: #{mean_output_replacer_conv.1} parent=0
    _
  %s8 = ssub.s32 1, %s6
  %s9 = scalar_select 0, %s8, %s6
  $region1: #{mean_output_replacer_conv.1} parent=0
    #allocation2 [shape = 'u8[20480]{0}', space=vmem, size = 0x5000, scoped, tag = 'input window, operand 2']
    #allocation3 [shape = 'u8[8192]{0}', space=vmem, size = 0x2000, scoped, tag = 'output window, operand 1']
    #allocation4 [shape = 's32[2]{0}', space=sflag, size = 0x8, scoped, tag = 'scoped memory for mean_output_replacer_conv.1']
    %10 = vsyncpa [#allocation4], 0
    %s11 = scalar_lea.sflag [#allocation4], 1
    %12 = vsyncpa %s11, 0
    loop: start=0, step=1, limit=6
    $region2: #{mean_output_replacer_conv.1} parent=1 // loop_pre_header
      _
    $region3: #{mean_output_replacer_conv.1} parent=1 // loop_header
      %s14 = sphi 0, %s18
      %p15 = scmp.ge.s32.totalorder %s14, 6
      %s22 = sphi 0, %s22
      %s24 = sphi 0, %s22
      %s25 = sphi 0, %s24
      %s39 = sphi 0, %s25
      %s43 = sphi 0, %s43
      %s45 = sphi 0, %s43
      %s46 = sphi 0, %s45
      %s60 = sphi 0, %s46
      %s66 = sphi 0, %s68
      %s69 = sphi 0, %s66
      %s70 = sphi 0, %s69
      %s86 = sphi 0, %s70
      %s92 = sphi 0, %s94
      %s95 = sphi 0, %s92
      %s96 = sphi 0, %s95
      %s112 = sphi 0, %s96
      %s118 = sphi 0, %s120
      %s121 = sphi 0, %s118
      %s122 = sphi 0, %s121
      %s138 = sphi 0, %s122
    $region4: #{mean_output_replacer_conv.1} parent=1 // loop_header_branch
      %17 = sbr.rel (%p15) target = $region8
    $region5: #{mean_output_replacer_conv.1} parent=1 // loop_body
      %s19 = ssub.s32 %s14, 1
      %s20 = ssub.s32 %s14, 2
      %s21 = sadd.s32 %s14, 1
      %s23 = sadd.s32 %s22, 1
      %p26 = scmp.eq.s32.totalorder %s14, 3
      %p27 = scmp.ne.s32.totalorder %s22, %s24
      %p28 = scmp.eq.s32.totalorder %s14, 0
      %p29 = por %p27, %p28
      %p30 = scmp.ne.s32.totalorder %s22, %s24
      %p31 = scmp.eq.s32.totalorder %s19, 3
      %p32 = por %p30, %p31
      %p33 = scmp.ne.s32.totalorder %s24, %s25
      %p34 = scmp.eq.s32.totalorder %s19, 0
      %p35 = por %p33, %p34
      %p36 = scmp.ne.s32.totalorder %s24, %s25
      %p37 = scmp.eq.s32.totalorder %s20, 3
      %p38 = por %p36, %p37
      %p40 = scmp.ne.s32.totalorder %s25, %s39
      %p41 = scmp.eq.s32.totalorder %s20, 0
      %p42 = por %p40, %p41
      %s44 = sadd.s32 %s43, 1
      %p47 = scmp.eq.s32.totalorder %s14, 3
      %p48 = scmp.ne.s32.totalorder %s43, %s45
      %p49 = scmp.eq.s32.totalorder %s14, 0
      %p50 = por %p48, %p49
      %p51 = scmp.ne.s32.totalorder %s43, %s45
      %p52 = scmp.eq.s32.totalorder %s19, 3
      %p53 = por %p51, %p52
      %p54 = scmp.ne.s32.totalorder %s45, %s46
      %p55 = scmp.eq.s32.totalorder %s19, 0
      %p56 = por %p54, %p55
      %p57 = scmp.ne.s32.totalorder %s45, %s46
      %p58 = scmp.eq.s32.totalorder %s20, 3
      %p59 = por %p57, %p58
      %p61 = scmp.ne.s32.totalorder %s46, %s60
      %p62 = scmp.eq.s32.totalorder %s20, 0
      %p63 = por %p61, %p62
      %s64 = ssub.s32 %s14, %s21
      %p65 = scmp.eq.s32.totalorder %s64, 0
      %s67 = sadd.s32 %s66, 1
      %s68 = scalar_select %p65, %s66, %s67
      %p71 = pneg %p65
      %p72 = scmp.eq.s32.totalorder %s14, 3
      %p73 = por %p71, %p72
      %p74 = scmp.ne.s32.totalorder %s66, %s69
      %p75 = scmp.eq.s32.totalorder %s14, 0
      %p76 = por %p74, %p75
      %p77 = scmp.ne.s32.totalorder %s66, %s69
      %p78 = scmp.eq.s32.totalorder %s19, 3
      %p79 = por %p77, %p78
      %p80 = scmp.ne.s32.totalorder %s69, %s70
      %p81 = scmp.eq.s32.totalorder %s19, 0
      %p82 = por %p80, %p81
      %p83 = scmp.ne.s32.totalorder %s69, %s70
      %p84 = scmp.eq.s32.totalorder %s20, 3
      %p85 = por %p83, %p84
      %p87 = scmp.ne.s32.totalorder %s70, %s86
      %p88 = scmp.eq.s32.totalorder %s20, 0
      %p89 = por %p87, %p88
      %s90 = ssub.s32 %s14, %s21
      %p91 = scmp.eq.s32.totalorder %s90, 0
      %s93 = sadd.s32 %s92, 1
      %s94 = scalar_select %p91, %s92, %s93
      %p97 = pneg %p91
      %p98 = scmp.eq.s32.totalorder %s14, 3
      %p99 = por %p97, %p98
      %p100 = scmp.ne.s32.totalorder %s92, %s95
      %p101 = scmp.eq.s32.totalorder %s14, 0
      %p102 = por %p100, %p101
      %p103 = scmp.ne.s32.totalorder %s92, %s95
      %p104 = scmp.eq.s32.totalorder %s19, 3
      %p105 = por %p103, %p104
      %p106 = scmp.ne.s32.totalorder %s95, %s96
      %p107 = scmp.eq.s32.totalorder %s19, 0
      %p108 = por %p106, %p107
      %p109 = scmp.ne.s32.totalorder %s95, %s96
      %p110 = scmp.eq.s32.totalorder %s20, 3
      %p111 = por %p109, %p110
      %p113 = scmp.ne.s32.totalorder %s96, %s112
      %p114 = scmp.eq.s32.totalorder %s20, 0
      %p115 = por %p113, %p114
      %s116 = ssub.s32 %s14, %s21
      %p117 = scmp.eq.s32.totalorder %s116, 0
      %s119 = sadd.s32 %s118, 1
      %s120 = scalar_select %p117, %s118, %s119
      %p123 = pneg %p117
      %p124 = scmp.eq.s32.totalorder %s14, 3
      %p125 = por %p123, %p124
      %p126 = scmp.ne.s32.totalorder %s118, %s121
      %p127 = scmp.eq.s32.totalorder %s14, 0
      %p128 = por %p126, %p127
      %p129 = scmp.ne.s32.totalorder %s118, %s121
      %p130 = scmp.eq.s32.totalorder %s19, 3
      %p131 = por %p129, %p130
      %p132 = scmp.ne.s32.totalorder %s121, %s122
      %p133 = scmp.eq.s32.totalorder %s19, 0
      %p134 = por %p132, %p133
      %p135 = scmp.ne.s32.totalorder %s121, %s122
      %p136 = scmp.eq.s32.totalorder %s20, 3
      %p137 = por %p135, %p136
      %p139 = scmp.ne.s32.totalorder %s122, %s138
      %p140 = scmp.eq.s32.totalorder %s20, 0
      %p141 = por %p139, %p140
      %p142 = scmp.le.s32.totalorder 1, %s14
      %p143 = scmp.lt.s32.totalorder %s14, 5
      %p144 = pnand %p142, %p143
      %p145 = pneg %p144
      // Predicated region
      $region9: #{mean_output_replacer_conv.1} parent=5 // pred_check
        _
      $region10: #{mean_output_replacer_conv.1} parent=5 // pred_check_branch
        %147 = sbr.rel (%p144) target = $region12
      $region11: #{mean_output_replacer_conv.1} parent=5 // pred_region
        %s148 = ssub.s32 %s14, 1
        // Predicated region
        $region13: #{mean_output_replacer_conv.1} parent=11 // pred_check
          %p149 = pneg %p35
        $region14: #{mean_output_replacer_conv.1} parent=11 // pred_check_branch
          %151 = sbr.rel (%p149) target = $region16
        $region15: #{mean_output_replacer_conv.1} parent=11 // pred_region
          _
        $region16: #{mean_output_replacer_conv.1} parent=11 // pred_fallthru
          _
        // Predicated region
        $region17: #{mean_output_replacer_conv.1} parent=11 // pred_check
          %p152 = pneg %p56
        $region18: #{mean_output_replacer_conv.1} parent=11 // pred_check_branch
          %154 = sbr.rel (%p152) target = $region20
        $region19: #{mean_output_replacer_conv.1} parent=11 // pred_region
          _
        $region20: #{mean_output_replacer_conv.1} parent=11 // pred_fallthru
          _
      $region12: #{mean_output_replacer_conv.1} parent=5 // pred_fallthru
        _
      %p155 = scmp.lt.s32.totalorder %s14, 4
      // Predicated region
      $region21: #{mean_output_replacer_conv.1} parent=5 // pred_check
        %p156 = pneg %p155
      $region22: #{mean_output_replacer_conv.1} parent=5 // pred_check_branch
        %158 = sbr.rel (%p156) target = $region24
      $region23: #{mean_output_replacer_conv.1} parent=5 // pred_region
        // Predicated region
        $region25: #{mean_output_replacer_conv.1} parent=23 // pred_check
          %p159 = pneg %p76
        $region26: #{mean_output_replacer_conv.1} parent=23 // pred_check_branch
          %161 = sbr.rel (%p159) target = $region28
        $region27: #{mean_output_replacer_conv.1} parent=23 // pred_region
          %s162 = sand.u32 %s66, 1
          %s163 = sand.u32 %s66, 1
          %s164 = smul.addr %s163, 20
          %s165 = scalar_lea.vmem [#allocation2], %s164
          %s166 = smul.addr %s14, 4
          %s167 = scalar_lea.vmem %s2, %s166
          // Predicated region
          $region29: #{mean_output_replacer_conv.1} parent=27 // pred_check
            _
          $region30: #{mean_output_replacer_conv.1} parent=27 // pred_check_branch
            %169 = sbr.rel (0) target = $region32
          $region31: #{mean_output_replacer_conv.1} parent=27 // pred_region
            // Predicated region
            $region33: #{mean_output_replacer_conv.1} parent=31 // pred_check
              _
            $region34: #{mean_output_replacer_conv.1} parent=31 // pred_check_branch
              %171 = sbr.rel target = $region36
            $region35: #{mean_output_replacer_conv.1} parent=31 // pred_region
              // Predicated region
              $region48: #{mean_output_replacer_conv.1} parent=35 // pred_check
                _
              $region49: #{mean_output_replacer_conv.1} parent=35 // pred_check_branch
                %194 = sbr.rel (0) target = $region51
              $region50: #{mean_output_replacer_conv.1} parent=35 // pred_region
                loop: start=0, step=1, limit=1
                $region52: #{mean_output_replacer_conv.1} parent=50 // loop_pre_header
                  _
                $region53: #{mean_output_replacer_conv.1} parent=50 // loop_header
                  %s196 = sphi 0, %s200
                  %p197 = scmp.ge.s32.totalorder %s196, 1
                  %s201 = sphi %s167, %s167
                  %s202 = sphi %s165, %s165
                $region54: #{mean_output_replacer_conv.1} parent=50 // loop_header_branch
                  %199 = sbr.rel (%p197) target = $region58
                $region55: #{mean_output_replacer_conv.1} parent=50 // loop_body
                  _
                $region56: #{mean_output_replacer_conv.1} parent=50 // loop_footer
                  %s200 = sadd.s32 1, %s196
                $region57: #{mean_output_replacer_conv.1} parent=50 // loop_footer_branch
                  %195 = sbr.rel target = $region53
                $region58: #{mean_output_replacer_conv.1} parent=50 // loop_exit
                  _
                loop: start=0, step=1, limit=1
                $region59: #{mean_output_replacer_conv.1} parent=50 // loop_pre_header
                  _
                $region60: #{mean_output_replacer_conv.1} parent=50 // loop_header
                  %s205 = sphi 0, %s209
                  %p206 = scmp.ge.s32.totalorder %s205, 1
                  %s210 = sphi %s167, %s167
                  %s211 = sphi %s165, %s165
                $region61: #{mean_output_replacer_conv.1} parent=50 // loop_header_branch
                  %208 = sbr.rel (%p206) target = $region65
                $region62: #{mean_output_replacer_conv.1} parent=50 // loop_body
                  %v212 = vld [vmem:[%s210] sm:$0xf]
                  %213 = vst [vmem:[%s211] sm:$0xf] %v212
                  %v214 = vld [vmem:[%s210 + $0x10] sm:$0xf]
                  %215 = vst [vmem:[%s211 + $0x4] sm:$0xf] %v214
                  %v216 = vld [vmem:[%s210 + $0x20] sm:$0xf]
                  %217 = vst [vmem:[%s211 + $0x8] sm:$0xf] %v216
                  %v218 = vld [vmem:[%s210 + $0x30] sm:$0xf]
                  %219 = vst [vmem:[%s211 + $0xc] sm:$0xf] %v218
                  %v220 = vld [vmem:[%s210 + $0x40] sm:$0xf]
                  %221 = vst [vmem:[%s211 + $0x10] sm:$0xf] %v220
                $region63: #{mean_output_replacer_conv.1} parent=50 // loop_footer
                  %s209 = sadd.s32 1, %s205
                $region64: #{mean_output_replacer_conv.1} parent=50 // loop_footer_branch
                  %204 = sbr.rel target = $region60
                $region65: #{mean_output_replacer_conv.1} parent=50 // loop_exit
                  _
              $region51: #{mean_output_replacer_conv.1} parent=35 // pred_fallthru
                _
            $region36: #{mean_output_replacer_conv.1} parent=31 // pred_fallthru
              _
            // Predicated region
            $region37: #{mean_output_replacer_conv.1} parent=31 // pred_check
              _
            $region38: #{mean_output_replacer_conv.1} parent=31 // pred_check_branch
              %173 = sbr.rel (0) target = $region40
            $region39: #{mean_output_replacer_conv.1} parent=31 // pred_region
              loop: start=0, step=1, limit=1
              $region41: #{mean_output_replacer_conv.1} parent=39 // loop_pre_header
                _
              $region42: #{mean_output_replacer_conv.1} parent=39 // loop_header
                %s176 = sphi 0, %s180
                %p177 = scmp.ge.s32.totalorder %s176, 1
                %s181 = sphi %s167, %s167
                %s182 = sphi %s165, %s165
              $region43: #{mean_output_replacer_conv.1} parent=39 // loop_header_branch
                %179 = sbr.rel (%p177) target = $region47
              $region44: #{mean_output_replacer_conv.1} parent=39 // loop_body
                %v183 = vld [vmem:[%s181] sm:$0xf]
                %184 = vst [vmem:[%s182] sm:$0xf] %v183
                %v185 = vld [vmem:[%s181 + $0x10] sm:$0xf]
                %186 = vst [vmem:[%s182 + $0x4] sm:$0xf] %v185
                %v187 = vld [vmem:[%s181 + $0x20] sm:$0xf]
                %188 = vst [vmem:[%s182 + $0x8] sm:$0xf] %v187
                %v189 = vld [vmem:[%s181 + $0x30] sm:$0xf]
                %190 = vst [vmem:[%s182 + $0xc] sm:$0xf] %v189
                %v191 = vld [vmem:[%s181 + $0x40] sm:$0xf]
                %192 = vst [vmem:[%s182 + $0x10] sm:$0xf] %v191
              $region45: #{mean_output_replacer_conv.1} parent=39 // loop_footer
                %s180 = sadd.s32 1, %s176
              $region46: #{mean_output_replacer_conv.1} parent=39 // loop_footer_branch
                %175 = sbr.rel target = $region42
              $region47: #{mean_output_replacer_conv.1} parent=39 // loop_exit
                _
            $region40: #{mean_output_replacer_conv.1} parent=31 // pred_fallthru
              _
          $region32: #{mean_output_replacer_conv.1} parent=27 // pred_fallthru
            _
          %222 = vnop
        $region28: #{mean_output_replacer_conv.1} parent=23 // pred_fallthru
          _
      $region24: #{mean_output_replacer_conv.1} parent=5 // pred_fallthru
        _
      %p223 = scmp.le.s32.totalorder 1, %s14
      %p224 = scmp.lt.s32.totalorder %s14, 5
      %p225 = pnand %p223, %p224
      %p226 = pneg %p225
      // Predicated region
      $region66: #{mean_output_replacer_conv.1} parent=5 // pred_check
        _
      $region67: #{mean_output_replacer_conv.1} parent=5 // pred_check_branch
        %228 = sbr.rel (%p225) target = $region69
      $region68: #{mean_output_replacer_conv.1} parent=5 // pred_region
        %s229 = ssub.s32 %s14, 1
        %s230 = sand.u32 %s69, 1
        %s231 = sand.u32 %s69, 1
        %s232 = smul.addr %s231, 20
        %s233 = scalar_lea.vmem [#allocation2], %s232
        // Predicated region
        $region70: #{mean_output_replacer_conv.1} parent=68 // pred_check
          %p234 = pneg %p82
        $region71: #{mean_output_replacer_conv.1} parent=68 // pred_check_branch
          %236 = sbr.rel (%p234) target = $region73
        $region72: #{mean_output_replacer_conv.1} parent=68 // pred_region
          _
        $region73: #{mean_output_replacer_conv.1} parent=68 // pred_fallthru
          _
        %p237 = pneg %p35
        %p238 = pneg %p32
        %p239 = pneg %p56
        %p240 = pneg %p53
        %s241 = sand.u32 %s69, 1
        %s242 = sand.u32 %s69, 1
        %s243 = smul.addr %s242, 20
        %s244 = scalar_lea.vmem [#allocation2], %s243
        %p245 = pneg %p82
        %p246 = pneg %p79
        %p247 = pneg %p108
        %p248 = pneg %p105
        %p249 = scmp.lt.s32.totalorder %s19, 3
        %s250 = scalar_select %p249, %s19, 3
        %s251 = smul.addr %s250, 8
        %s252 = scalar_lea.vmem %s3, %s251
        %p253 = pneg %p134
        %p254 = pneg %p131
        %s255 = sand.u32 %s121, 1
        %s256 = scalar_lea.sflag [#allocation4], %s255
        %s257 = sand.u32 %s121, 1
        %s258 = smul.addr %s257, 8
        %s259 = scalar_lea.vmem [#allocation3], %s258
        %p260 = scmp.lt.s32.totalorder %s19, 3
        %s261 = scalar_select %p260, %s19, 3
        %s262 = smul.addr %s261, 8
        %s263 = scalar_lea.vmem %s3, %s262
        %v265 = vld [vmem:[%s0] sm:$0xf]
        %v266 = vld [vmem:[%s233] sm:$0xf]
        %v267 = vld [vmem:[%s233 + $0x4] sm:$0xf]
        %v268 = vld [vmem:[%s233 + $0x8] sm:$0xf]
        %v269 = vld [vmem:[%s233 + $0xc] sm:$0xf]
        %v270 = vld [vmem:[%s233 + $0x10] sm:$0x3]
        %v271 = vld [vmem:[%s1] sm:$0xff]
        %273 = vset.pattern.permute.xlu0 0
        %274 = vperm.xlu0 %273, %v271
        %v275 = vpop.permute.xlu0 %274
        %v282 = vunpack.c.l.b16 %v266
        %v283 = vunpack.c.l.b16 %v267
        %v284 = vunpack.c.l.b16 %v268
        %v285 = vunpack.c.l.b16 %v269
        %v286 = vunpack.c.l.b16 %v270
        %v287 = vpack.c.b16 %v283, %v282
        %v288 = vpack.c.b16 %v285, %v284
        %v289 = vpack.c.b16 %v286, %v286
        %vm292 = vcmask 293888
        %v294 = vsel %vm292, %v265, 0
        %vm296 = vcmask 1041408
        %v298 = vsel %vm296, %v289, 0
        %300 = vmatprep.subr.bf16.mxu0 0
        %301 = vmatpush1.bf16.msra.mxu0 %v287
        %302 = vmatprep.subr.bf16.mxu0 0
        %303 = vmatpush1.bf16.msra.mxu0 %v288
        %304 = vmatprep.subr.bf16.mxu0 0
        %305 = vmatpush1.bf16.msra.mxu0 %v298
        %306 = vmatprep.subr.bf16.mxu0 0
        %307 = vmatpush1.bf16.msra.mxu0 0
        %308 = vmatprep.subr.bf16.mxu0 0
        %309 = vmatpush1.bf16.msra.mxu0 0
        %310 = vmatprep.subr.bf16.mxu0 0
        %311 = vmatpush1.bf16.msra.mxu0 0
        %312 = vmatprep.subr.bf16.mxu0 0
        %313 = vmatpush1.bf16.msra.mxu0 0
        %314 = vmatprep.subr.bf16.mxu0 0
        %315 = vmatpush1.bf16.msra.mxu0 0
        %316 = vmatprep.subr.bf16.mxu0 0
        %317 = vmatpush1.bf16.msra.mxu0 0
        %318 = vmatprep.subr.bf16.mxu0 0
        %319 = vmatpush1.bf16.msra.mxu0 0
        %320 = vmatprep.subr.bf16.mxu0 0
        %321 = vmatpush1.bf16.msra.mxu0 0
        %322 = vmatprep.subr.bf16.mxu0 0
        %323 = vmatpush1.bf16.msra.mxu0 0
        %324 = vmatprep.subr.bf16.mxu0 0
        %325 = vmatpush1.bf16.msra.mxu0 0
        %326 = vmatprep.subr.bf16.mxu0 0
        %327 = vmatpush1.bf16.msra.mxu0 0
        %328 = vmatprep.subr.bf16.mxu0 0
        %329 = vmatpush1.bf16.msra.mxu0 0
        %330 = vmatprep.subr.bf16.mxu0 0
        %331 = vmatpush1.bf16.msra.mxu0 0
        %332 = vmatprep.mubr.bf16.mxu0 0
        %333 = vmatmul.mubr.bf16.gmra.mrb[0].mxu0 %v294
        %v334 = vpop.f32.mrb[0].mxu0
        %v335 = vadd.f32 %v275, %v334
        %v336 = vpop.f32.mrb[0].mxu0
        %v337 = vpop.f32.mrb[0].mxu0
        %v338 = vpop.f32.mrb[0].mxu0
        %339 = vdwg.mxu0
        %340 = vst [vmem:[%s263] sm:$0xff] %v335
        %v341 = vlaneseq
        %v342 = vand.u32 %v341, 127
        %s343 = smul.u32 %s19, 128
        %v344 = vstv %s343
        %v345 = vadd.s32 %v342, %v344
        %vm346 = vcmp.lt.s32.totalorder %v345, 512
        %v347 = vsel %vm346, %v335, 0.0
        %348 = vadd.xlane.f32.xlu0 %v347
        %v349 = vpop.xlane.xlu0 %348
        %350 = vst [vmem:[%s259] sm:$0xff] %v349
        %p351 = scmp.lt.s32.totalorder %s19, 3
        %s352 = scalar_select %p351, %s19, 3
        %s353 = smul.addr %s352, 8
        %s354 = scalar_lea.vmem %s3, %s353
        %s355 = sand.u32 %s121, 1
        %s356 = scalar_lea.sflag [#allocation4], %s355
        %s357 = sand.u32 %s121, 1
        %s358 = smul.addr %s357, 8
        %s359 = scalar_lea.vmem [#allocation3], %s358
        // Predicated region
        $region74: #{mean_output_replacer_conv.1} parent=68 // pred_check
          %p360 = pneg %p105
        $region75: #{mean_output_replacer_conv.1} parent=68 // pred_check_branch
          %362 = sbr.rel (%p360) target = $region77
        $region76: #{mean_output_replacer_conv.1} parent=68 // pred_region
          _
        $region77: #{mean_output_replacer_conv.1} parent=68 // pred_fallthru
          _
        // Predicated region
        $region78: #{mean_output_replacer_conv.1} parent=68 // pred_check
          %p363 = pneg %p131
        $region79: #{mean_output_replacer_conv.1} parent=68 // pred_check_branch
          %365 = sbr.rel (%p363) target = $region81
        $region80: #{mean_output_replacer_conv.1} parent=68 // pred_region
          %s367 = ssub.s32 128, 128
          %368 = vsyncadd %s356, %s367
          %s369 = smul.addr %s19, 128
          %s370 = scalar_lea.hbm %s4, %s369
          %s372 = sshll.u32 %s359, 4
          %s373 = int_to_ptr.vmem [resolvable:$true] %s372
          %375 = dma.vmem_to_hbm [thread:$0]  %s373, 128, %s370, %s356
        $region81: #{mean_output_replacer_conv.1} parent=68 // pred_fallthru
          _
      $region69: #{mean_output_replacer_conv.1} parent=5 // pred_fallthru
        _
      %p376 = scmp.le.s32.totalorder 2, %s14
      // Predicated region
      $region82: #{mean_output_replacer_conv.1} parent=5 // pred_check
        %p377 = pneg %p376
      $region83: #{mean_output_replacer_conv.1} parent=5 // pred_check_branch
        %379 = sbr.rel (%p377) target = $region85
      $region84: #{mean_output_replacer_conv.1} parent=5 // pred_region
        %s380 = ssub.s32 %s14, 2
        // Predicated region
        $region86: #{mean_output_replacer_conv.1} parent=84 // pred_check
          %p381 = pneg %p111
        $region87: #{mean_output_replacer_conv.1} parent=84 // pred_check_branch
          %383 = sbr.rel (%p381) target = $region89
        $region88: #{mean_output_replacer_conv.1} parent=84 // pred_region
          %p384 = scmp.lt.s32.totalorder %s20, 3
          %s385 = scalar_select %p384, %s20, 3
          %s386 = smul.addr %s385, 8
          %s387 = scalar_lea.vmem %s3, %s386
        $region89: #{mean_output_replacer_conv.1} parent=84 // pred_fallthru
          _
        // Predicated region
        $region90: #{mean_output_replacer_conv.1} parent=84 // pred_check
          %p388 = pneg %p137
        $region91: #{mean_output_replacer_conv.1} parent=84 // pred_check_branch
          %390 = sbr.rel (%p388) target = $region93
        $region92: #{mean_output_replacer_conv.1} parent=84 // pred_region
          %s391 = sand.u32 %s122, 1
          %s392 = scalar_lea.sflag [#allocation4], %s391
          %s393 = sand.u32 %s122, 1
          %s394 = smul.addr %s393, 8
          %s395 = scalar_lea.vmem [#allocation3], %s394
          %396 = dma.done %s392, 128
        $region93: #{mean_output_replacer_conv.1} parent=84 // pred_fallthru
          _
      $region85: #{mean_output_replacer_conv.1} parent=5 // pred_fallthru
        _
    $region6: #{mean_output_replacer_conv.1} parent=1 // loop_footer
      %s18 = sadd.s32 1, %s14
    $region7: #{mean_output_replacer_conv.1} parent=1 // loop_footer_branch
      %13 = sbr.rel target = $region3
    $region8: #{mean_output_replacer_conv.1} parent=1 // loop_exit
      _
    %397 = vsyncpa [#allocation4], 1
    %s398 = scalar_lea.sflag [#allocation4], 1
    %399 = vsyncpa %s398, 1

</llo_original>
